<compile_context>
chip_gen: v5e
topology: v5e:2x2
jax: 0.10.0
libtpu: 0.0.40
codegen_flags: <defaults>
</compile_context>

<pallas_src>
import jax
import jax.numpy as jnp
from jax.experimental import pallas as pl
from jax.experimental.pallas import tpu as pltpu


# ----------------------------- Pallas kernel ------------------------------ #
def _make_detection_kernel(num_anchors, num_classes):
    A = num_anchors
    K = num_classes + 1          # obj + classes

    def kernel(pbox_ref, pobjcls_ref, tbox_ref, tobjcls_ref, out_ref):
        # pbox_ref    : (A*4, LN)   pred dtype (f32 or bf16)
        # pobjcls_ref : (A*K, LN)   pred dtype
        # tbox_ref    : (4, LN)     f32
        # tobjcls_ref : (K, LN)     f32  (row 0 = objectness, rows 1: = classes)
        # out_ref     : (1, 8, 128) f32  partial sums for this lane tile
        obj_s = jnp.float32(0.0)
        cls_s = jnp.float32(0.0)
        box_s = jnp.float32(0.0)

        for a in range(A):                       # static unroll; A is small
            # Re-load targets per anchor: VMEM->vreg loads are cheap and this
            # keeps live ranges to one iteration (no wide loop-carried values).
            tb = tbox_ref[...]                   # (4, LN)
            to = tobjcls_ref[...]                # (K, LN)
            obj_t = to[0:1, :]                   # (1, LN) shared per-cell mask

            # ---- box MSE term (obj-masked preds vs. box target) ----------
            pb = pbox_ref[pl.ds(4 * a, 4), :].astype(jnp.float32)    # (4, LN)
            d = pb * obj_t - tb
            box_s = box_s + jnp.sum(d * d)

            # ---- fused obj+cls BCE-with-logits ----------------------------
            x = pobjcls_ref[pl.ds(K * a, K), :].astype(jnp.float32)  # (K, LN)
            bce = (jnp.maximum(x, 0.0) - x * to
                   + jnp.log(1.0 + jnp.exp(-jnp.abs(x))))
            s_all = jnp.sum(bce)
            s_obj = jnp.sum(bce[0:1, :])
            obj_s = obj_s + s_obj
            cls_s = cls_s + (s_all - s_obj)

        # One lane-dense (8,128) slab per grid step (unmasked full-vreg store):
        # [0,0]=obj partial, [1,0]=cls partial, [2,0]=box partial, rest 0.
        r = jax.lax.broadcasted_iota(jnp.int32, (8, 128), 0)
        c = jax.lax.broadcasted_iota(jnp.int32, (8, 128), 1)
        at0 = ((r == 0) & (c == 0)).astype(jnp.float32)
        at1 = ((r == 1) & (c == 0)).astype(jnp.float32)
        at2 = ((r == 2) & (c == 0)).astype(jnp.float32)
        out_ref[0] = obj_s * at0 + cls_s * at1 + box_s * at2

    return kernel


# ------------------------------- JAX glue --------------------------------- #
# Lane-tile upper bound (multiple of 128): big enough to amortise the
# ~0.35us/grid-step overhead, small enough to keep VMEM / vreg pressure tame
# on every generation (incl. v7x's 64 MiB VMEM).
_LANE_TILE_TARGET = 8192


def _round_up(x, m):
    return ((x + m - 1) // m) * m


def _pad_lanes(x, n_to, value):
    pad = n_to - x.shape[1]
    if pad == 0:
        return x
    return jnp.pad(x, ((0, 0), (0, pad)), constant_values=value)


def _prep_level_pred(pred):
    """(B, A, H, W, C+5) -> channel-grouped, lane-dense slabs
    pred_box (A*4, B*H*W) and pred_objcls (A*(1+C), B*H*W).  Dtype preserved
    (bf16 stays bf16; the kernel upcasts after the load)."""
    B, A, H, W, Cp5 = pred.shape
    N = B * H * W
    p = jnp.transpose(pred, (1, 4, 0, 2, 3)).reshape(A, Cp5, N)
    pred_box = p[:, :4, :].reshape(A * 4, N)
    pred_objcls = p[:, 4:, :].reshape(A * (Cp5 - 4), N)
    return pred_box, pred_objcls


def _build_cell_targets(targets, B, H, W, num_classes):
    """Per-grid-cell targets (shared across anchors), built directly in
    channel-first layout via batched scatters:
      tgt_box    (4,   B*HW)  rows = box regression target
      tgt_objcls (1+C, B*HW)  row 0 = objectness, rows 1: = class one-hot.
    The Python loop over images remains because `targets` is a ragged list;
    per image everything is one vectorized scatter.  Duplicate-cell semantics:
    class one-hots accumulate (all set to 1); box/obj follow the scatter's
    duplicate resolution (demo inputs have no duplicate cells)."""
    HW = H * W
    C = num_classes
    box_t = jnp.zeros((4, B * HW), jnp.float32)
    objcls_t = jnp.zeros((1 + C, B * HW), jnp.float32)
    for b in range(B):
        t = jnp.asarray(targets[b], jnp.float32)
        if t.shape[0] == 0:
            continue
        gx = jnp.clip((t[:, 1] * W).astype(jnp.int32), 0, W - 1)
        gy = jnp.clip((t[:, 2] * H).astype(jnp.int32), 0, H - 1)
        flat = b * HW + gy * W + gx
        cls_id = t[:, 0].astype(jnp.int32)
        box_t = box_t.at[:, flat].set(t[:, 1:5].T)
        objcls_t = objcls_t.at[0, flat].set(1.0)
        objcls_t = objcls_t.at[1 + cls_id, flat].set(1.0)
    return box_t, objcls_t


def detection_loss(predictions, targets, num_classes,
                   cls_weight=1.0, obj_weight=1.0, box_weight=1.0):
    A = predictions[0].shape[1]
    K = num_classes + 1

    # Lane tile: capped by the smallest level so no level drowns in padding.
    n_per_level = [int(p.shape[0] * p.shape[2] * p.shape[3]) for p in predictions]
    LN = max(128, min(_LANE_TILE_TARGET, _round_up(min(n_per_level), 128)))
    assert LN % 128 == 0

    pb_parts, po_parts, tb_parts, to_parts = [], [], [], []
    level_meta = []
    blk_off = 0
    for pred in predictions:
        B, A_, H, W, Cp5 = pred.shape
        assert A_ == A and Cp5 == num_classes + 5
        N = B * H * W
        Np = _round_up(N, LN)
        nb = Np // LN

        pbox, pobjcls = _prep_level_pred(pred)
        tbox, tobjcls = _build_cell_targets(targets, B, H, W, num_classes)

        # Padded columns: obj/cls logits get a large negative value so their
        # BCE contribution is ~exp(-30); targets 0; box term is obj-masked to 0.
        pb_parts.append(_pad_lanes(pbox, Np, 0.0))
        po_parts.append(_pad_lanes(pobjcls, Np, -30.0))
        tb_parts.append(_pad_lanes(tbox, Np, 0.0))
        to_parts.append(_pad_lanes(tobjcls, Np, 0.0))
        level_meta.append((blk_off, nb, B, H, W))
        blk_off += nb
    n_blocks = blk_off

    pb = jnp.concatenate(pb_parts, axis=1)
    po = jnp.concatenate(po_parts, axis=1)
    tb = jnp.concatenate(tb_parts, axis=1)
    to = jnp.concatenate(to_parts, axis=1)

    out = pl.pallas_call(
        _make_detection_kernel(A, num_classes),
        out_shape=jax.ShapeDtypeStruct((n_blocks, 8, 128), jnp.float32),
        grid_spec=pltpu.PrefetchScalarGridSpec(
            num_scalar_prefetch=0,
            grid=(n_blocks,),
            in_specs=[
                pl.BlockSpec((4 * A, LN), lambda i: (0, i)),
                pl.BlockSpec((K * A, LN), lambda i: (0, i)),
                pl.BlockSpec((4, LN), lambda i: (0, i)),
                pl.BlockSpec((K, LN), lambda i: (0, i)),
            ],
            out_specs=pl.BlockSpec((1, 8, 128), lambda i: (i, 0, 0)),
        ),
        compiler_params=pltpu.CompilerParams(
            # Each lane tile writes its own partial-sum slab -> fully parallel
            # (splits across the 2 TensorCores on v7x).
            dimension_semantics=("parallel",),
            vmem_limit_bytes=32 * 1024 * 1024,
        ),
    )(pb, po, tb, to)

    obj_parts = out[:, 0, 0]
    cls_parts = out[:, 1, 0]
    box_parts = out[:, 2, 0]

    total_loss = jnp.float32(0.0)
    loss_dict = {}
    for (blk0, nb, B, H, W) in level_meta:
        n_el = B * A * H * W
        sl = slice(blk0, blk0 + nb)
        obj_loss = jnp.sum(obj_parts[sl]) / n_el * obj_weight            # mean BCE
        cls_loss = jnp.sum(cls_parts[sl]) / (n_el * num_classes) * cls_weight
        box_loss = jnp.sum(box_parts[sl]) / (n_el * 4) * box_weight      # mean MSE
        total_loss = total_loss + obj_loss + cls_loss + box_loss
        # Matches PyTorch: dict keeps only the LAST level's component losses.
        loss_dict['obj_loss'] = obj_loss
        loss_dict['cls_loss'] = cls_loss
        loss_dict['box_loss'] = box_loss
    loss_dict['total_loss'] = total_loss
    return loss_dict


# ----------------------------- pure-JAX reference -------------------------- #
def _reference(predictions, targets, num_classes):
    total = jnp.float32(0.0)
    out = {}
    for pred in predictions:
        B, A, H, W, Cp5 = pred.shape
        HW = H * W
        obj_m = jnp.zeros((B, A, HW), jnp.float32)
        cls_m = jnp.zeros((B, A, HW, num_classes), jnp.float32)
        box_m = jnp.zeros((B, A, HW, 4), jnp.float32)
        for b in range(B):
            tgt = targets[b]
            n = int(tgt.shape[0])
            if n == 0:
                continue
            gx = jnp.clip((tgt[:, 1] * W).astype(jnp.int32), 0, W - 1)
            gy = jnp.clip((tgt[:, 2] * H).astype(jnp.int32), 0, H - 1)
            idx = gy * W + gx
            cls_id = tgt[:, 0].astype(jnp.int32)
            for i in range(n):
                obj_m = obj_m.at[b, :, idx[i]].set(1.0)
                cls_m = cls_m.at[b, :, idx[i], cls_id[i]].set(1.0)
                box_m = box_m.at[b, :, idx[i], :].set(tgt[i, 1:5])
        p = pred.reshape(B, A, HW, Cp5).astype(jnp.float32)
        pred_box, pred_obj, pred_cls = p[..., :4], p[..., 4], p[..., 5:]

        def bce(x, z):
            return jnp.mean(jnp.maximum(x, 0.0) - x * z
                            + jnp.log1p(jnp.exp(-jnp.abs(x))))

        obj_loss = bce(pred_obj, obj_m)
        cls_loss = bce(pred_cls, cls_m)
        box_loss = jnp.mean((pred_box * obj_m[..., None] - box_m) ** 2)
        total = total + obj_loss + cls_loss + box_loss
        out['obj_loss'], out['cls_loss'], out['box_loss'] = obj_loss, cls_loss, box_loss
    out['total_loss'] = total
    return out


# ---------------------------------- main ----------------------------------- #
if __name__ == "__main__":
    key = jax.random.PRNGKey(0)
    num_classes = 4
    # anchors are stored by the PyTorch module but never used in forward()
    anchors = jnp.asarray([[10., 13.], [16., 30.], [33., 23.]], jnp.float32)
    A = anchors.shape[0]
    B = 2

    k1, k2 = jax.random.split(key)
    predictions = [
        jax.random.normal(k1, (B, A, 8, 8, num_classes + 5), jnp.float32),
        jax.random.normal(k2, (B, A, 4, 4, num_classes + 5), jnp.float32),
    ]
    # targets[b]: [num_objects, 5] rows of [class_id, x_c, y_c, w, h]
    targets = [
        jnp.array([[1.0, 0.10, 0.10, 0.20, 0.30],
                   [2.0, 0.60, 0.40, 0.10, 0.10],
                   [0.0, 0.90, 0.90, 0.30, 0.20]], jnp.float32),
        jnp.array([[3.0, 0.30, 0.70, 0.25, 0.15],
                   [1.0, 0.80, 0.20, 0.05, 0.40]], jnp.float32),
    ]

    out = detection_loss(predictions, targets, num_classes)
    jax.block_until_ready(out)

    ref = _reference(predictions, targets, num_classes)
    for name in ('obj_loss', 'cls_loss', 'box_loss', 'total_loss'):
        assert abs(float(out[name]) - float(ref[name])) < 1e-4, (
            name, float(out[name]), float(ref[name]))

    print("KERNEL_OK")
</pallas_src>

<mosaic_0001>
module attributes {stable_mosaic.version = 11 : i64} {
  func.func @kernel(%arg0: i32, %arg1: memref<12x128xf32, #tpu.memory_space<vmem>>, %arg2: memref<15x128xf32, #tpu.memory_space<vmem>>, %arg3: memref<4x128xf32, #tpu.memory_space<vmem>>, %arg4: memref<5x128xf32, #tpu.memory_space<vmem>>, %arg5: memref<1x8x128xf32, #tpu.memory_space<vmem>>) attributes {dimension_semantics = [#tpu.dimension_semantics<parallel>], iteration_bounds = array<i64: 2>, scalar_prefetch = 0 : i64, scratch_operands = 0 : i64, tpu.core_type = #tpu.core_type<tc>, window_params = [{transform_indices = @transform_0, window_bounds = array<i64: 12, 128>}, {transform_indices = @transform_1, window_bounds = array<i64: 15, 128>}, {transform_indices = @transform_2, window_bounds = array<i64: 4, 128>}, {transform_indices = @transform_3, window_bounds = array<i64: 5, 128>}, {transform_indices = @transform_4, window_bounds = array<i64: 1, 8, 128>}]} {
    %c0 = arith.constant 0 : index
    %c0_0 = arith.constant 0 : index
    %0 = vector.load %arg3[%c0, %c0_0] : memref<4x128xf32, #tpu.memory_space<vmem>>, vector<4x128xf32>
    %c0_1 = arith.constant 0 : index
    %c0_2 = arith.constant 0 : index
    %1 = vector.load %arg4[%c0_1, %c0_2] : memref<5x128xf32, #tpu.memory_space<vmem>>, vector<5x128xf32>
    %2 = vector.extract_strided_slice %1 {offsets = [0, 0], sizes = [1, 128], strides = [1, 1]} : vector<5x128xf32> to vector<1x128xf32>
    %c0_3 = arith.constant 0 : index
    %c0_4 = arith.constant 0 : index
    %3 = vector.load %arg1[%c0_3, %c0_4] : memref<12x128xf32, #tpu.memory_space<vmem>>, vector<4x128xf32>
    %4 = vector.broadcast %2 : vector<1x128xf32> to vector<4x128xf32>
    %5 = arith.mulf %3, %4 : vector<4x128xf32>
    %6 = arith.subf %5, %0 : vector<4x128xf32>
    %7 = arith.mulf %6, %6 : vector<4x128xf32>
    %8 = vector.shape_cast %7 : vector<4x128xf32> to vector<1x4x128xf32>
    %cst = arith.constant dense<0.000000e+00> : vector<1xf32>
    %9 = vector.multi_reduction <add>, %8, %cst [1, 2] : vector<1x4x128xf32> to vector<1xf32>
    %10 = vector.shape_cast %9 : vector<1xf32> to vector<1x1x1xf32>
    %11 = vector.extract %10[0, 0, 0] : f32 from vector<1x1x1xf32>
    %cst_5 = arith.constant 0.000000e+00 : f32
    %12 = arith.addf %cst_5, %11 : f32
    %c0_6 = arith.constant 0 : index
    %c0_7 = arith.constant 0 : index
    %13 = vector.load %arg2[%c0_6, %c0_7] : memref<15x128xf32, #tpu.memory_space<vmem>>, vector<5x128xf32>
    %cst_8 = arith.constant 0.000000e+00 : f32
    %14 = vector.broadcast %cst_8 : f32 to vector<5x128xf32>
    %15 = arith.maximumf %13, %14 : vector<5x128xf32>
    %16 = arith.mulf %13, %1 : vector<5x128xf32>
    %17 = arith.subf %15, %16 : vector<5x128xf32>
    %18 = math.absf %13 : vector<5x128xf32>
    %cst_9 = arith.constant 0.000000e+00 : f32
    %19 = vector.broadcast %cst_9 : f32 to vector<5x128xf32>
    %20 = arith.subf %19, %18 : vector<5x128xf32>
    %21 = math.exp %20 : vector<5x128xf32>
    %cst_10 = arith.constant 1.000000e+00 : f32
    %22 = vector.broadcast %cst_10 : f32 to vector<5x128xf32>
    %23 = arith.addf %22, %21 : vector<5x128xf32>
    %24 = math.log %23 : vector<5x128xf32>
    %25 = arith.addf %17, %24 : vector<5x128xf32>
    %26 = vector.shape_cast %25 : vector<5x128xf32> to vector<1x5x128xf32>
    %cst_11 = arith.constant dense<0.000000e+00> : vector<1xf32>
    %27 = vector.multi_reduction <add>, %26, %cst_11 [1, 2] : vector<1x5x128xf32> to vector<1xf32>
    %28 = vector.shape_cast %27 : vector<1xf32> to vector<1x1x1xf32>
    %29 = vector.extract %28[0, 0, 0] : f32 from vector<1x1x1xf32>
    %30 = vector.extract_strided_slice %25 {offsets = [0, 0], sizes = [1, 128], strides = [1, 1]} : vector<5x128xf32> to vector<1x128xf32>
    %31 = vector.shape_cast %30 : vector<1x128xf32> to vector<1x1x128xf32>
    %cst_12 = arith.constant dense<0.000000e+00> : vector<1xf32>
    %32 = vector.multi_reduction <add>, %31, %cst_12 [1, 2] : vector<1x1x128xf32> to vector<1xf32>
    %33 = vector.shape_cast %32 : vector<1xf32> to vector<1x1x1xf32>
    %34 = vector.extract %33[0, 0, 0] : f32 from vector<1x1x1xf32>
    %cst_13 = arith.constant 0.000000e+00 : f32
    %35 = arith.addf %cst_13, %34 : f32
    %36 = arith.subf %29, %34 : f32
    %cst_14 = arith.constant 0.000000e+00 : f32
    %37 = arith.addf %cst_14, %36 : f32
    %c0_15 = arith.constant 0 : index
    %c0_16 = arith.constant 0 : index
    %38 = vector.load %arg3[%c0_15, %c0_16] : memref<4x128xf32, #tpu.memory_space<vmem>>, vector<4x128xf32>
    %c0_17 = arith.constant 0 : index
    %c0_18 = arith.constant 0 : index
    %39 = vector.load %arg4[%c0_17, %c0_18] : memref<5x128xf32, #tpu.memory_space<vmem>>, vector<5x128xf32>
    %40 = vector.extract_strided_slice %39 {offsets = [0, 0], sizes = [1, 128], strides = [1, 1]} : vector<5x128xf32> to vector<1x128xf32>
    %c4 = arith.constant 4 : index
    %c0_19 = arith.constant 0 : index
    %41 = vector.load %arg1[%c4, %c0_19] : memref<12x128xf32, #tpu.memory_space<vmem>>, vector<4x128xf32>
    %42 = vector.broadcast %40 : vector<1x128xf32> to vector<4x128xf32>
    %43 = arith.mulf %41, %42 : vector<4x128xf32>
    %44 = arith.subf %43, %38 : vector<4x128xf32>
    %45 = arith.mulf %44, %44 : vector<4x128xf32>
    %46 = vector.shape_cast %45 : vector<4x128xf32> to vector<1x4x128xf32>
    %cst_20 = arith.constant dense<0.000000e+00> : vector<1xf32>
    %47 = vector.multi_reduction <add>, %46, %cst_20 [1, 2] : vector<1x4x128xf32> to vector<1xf32>
    %48 = vector.shape_cast %47 : vector<1xf32> to vector<1x1x1xf32>
    %49 = vector.extract %48[0, 0, 0] : f32 from vector<1x1x1xf32>
    %50 = arith.addf %12, %49 : f32
    %c5 = arith.constant 5 : index
    %c0_21 = arith.constant 0 : index
    %51 = vector.load %arg2[%c5, %c0_21] : memref<15x128xf32, #tpu.memory_space<vmem>>, vector<5x128xf32>
    %cst_22 = arith.constant 0.000000e+00 : f32
    %52 = vector.broadcast %cst_22 : f32 to vector<5x128xf32>
    %53 = arith.maximumf %51, %52 : vector<5x128xf32>
    %54 = arith.mulf %51, %39 : vector<5x128xf32>
    %55 = arith.subf %53, %54 : vector<5x128xf32>
    %56 = math.absf %51 : vector<5x128xf32>
    %cst_23 = arith.constant 0.000000e+00 : f32
    %57 = vector.broadcast %cst_23 : f32 to vector<5x128xf32>
    %58 = arith.subf %57, %56 : vector<5x128xf32>
    %59 = math.exp %58 : vector<5x128xf32>
    %cst_24 = arith.constant 1.000000e+00 : f32
    %60 = vector.broadcast %cst_24 : f32 to vector<5x128xf32>
    %61 = arith.addf %60, %59 : vector<5x128xf32>
    %62 = math.log %61 : vector<5x128xf32>
    %63 = arith.addf %55, %62 : vector<5x128xf32>
    %64 = vector.shape_cast %63 : vector<5x128xf32> to vector<1x5x128xf32>
    %cst_25 = arith.constant dense<0.000000e+00> : vector<1xf32>
    %65 = vector.multi_reduction <add>, %64, %cst_25 [1, 2] : vector<1x5x128xf32> to vector<1xf32>
    %66 = vector.shape_cast %65 : vector<1xf32> to vector<1x1x1xf32>
    %67 = vector.extract %66[0, 0, 0] : f32 from vector<1x1x1xf32>
    %68 = vector.extract_strided_slice %63 {offsets = [0, 0], sizes = [1, 128], strides = [1, 1]} : vector<5x128xf32> to vector<1x128xf32>
    %69 = vector.shape_cast %68 : vector<1x128xf32> to vector<1x1x128xf32>
    %cst_26 = arith.constant dense<0.000000e+00> : vector<1xf32>
    %70 = vector.multi_reduction <add>, %69, %cst_26 [1, 2] : vector<1x1x128xf32> to vector<1xf32>
    %71 = vector.shape_cast %70 : vector<1xf32> to vector<1x1x1xf32>
    %72 = vector.extract %71[0, 0, 0] : f32 from vector<1x1x1xf32>
    %73 = arith.addf %35, %72 : f32
    %74 = arith.subf %67, %72 : f32
    %75 = arith.addf %37, %74 : f32
    %c0_27 = arith.constant 0 : index
    %c0_28 = arith.constant 0 : index
    %76 = vector.load %arg3[%c0_27, %c0_28] : memref<4x128xf32, #tpu.memory_space<vmem>>, vector<4x128xf32>
    %c0_29 = arith.constant 0 : index
    %c0_30 = arith.constant 0 : index
    %77 = vector.load %arg4[%c0_29, %c0_30] : memref<5x128xf32, #tpu.memory_space<vmem>>, vector<5x128xf32>
    %78 = vector.extract_strided_slice %77 {offsets = [0, 0], sizes = [1, 128], strides = [1, 1]} : vector<5x128xf32> to vector<1x128xf32>
    %c8 = arith.constant 8 : index
    %c0_31 = arith.constant 0 : index
    %79 = vector.load %arg1[%c8, %c0_31] : memref<12x128xf32, #tpu.memory_space<vmem>>, vector<4x128xf32>
    %80 = vector.broadcast %78 : vector<1x128xf32> to vector<4x128xf32>
    %81 = arith.mulf %79, %80 : vector<4x128xf32>
    %82 = arith.subf %81, %76 : vector<4x128xf32>
    %83 = arith.mulf %82, %82 : vector<4x128xf32>
    %84 = vector.shape_cast %83 : vector<4x128xf32> to vector<1x4x128xf32>
    %cst_32 = arith.constant dense<0.000000e+00> : vector<1xf32>
    %85 = vector.multi_reduction <add>, %84, %cst_32 [1, 2] : vector<1x4x128xf32> to vector<1xf32>
    %86 = vector.shape_cast %85 : vector<1xf32> to vector<1x1x1xf32>
    %87 = vector.extract %86[0, 0, 0] : f32 from vector<1x1x1xf32>
    %88 = arith.addf %50, %87 : f32
    %c10 = arith.constant 10 : index
    %c0_33 = arith.constant 0 : index
    %89 = vector.load %arg2[%c10, %c0_33] : memref<15x128xf32, #tpu.memory_space<vmem>>, vector<5x128xf32>
    %cst_34 = arith.constant 0.000000e+00 : f32
    %90 = vector.broadcast %cst_34 : f32 to vector<5x128xf32>
    %91 = arith.maximumf %89, %90 : vector<5x128xf32>
    %92 = arith.mulf %89, %77 : vector<5x128xf32>
    %93 = arith.subf %91, %92 : vector<5x128xf32>
    %94 = math.absf %89 : vector<5x128xf32>
    %cst_35 = arith.constant 0.000000e+00 : f32
    %95 = vector.broadcast %cst_35 : f32 to vector<5x128xf32>
    %96 = arith.subf %95, %94 : vector<5x128xf32>
    %97 = math.exp %96 : vector<5x128xf32>
    %cst_36 = arith.constant 1.000000e+00 : f32
    %98 = vector.broadcast %cst_36 : f32 to vector<5x128xf32>
    %99 = arith.addf %98, %97 : vector<5x128xf32>
    %100 = math.log %99 : vector<5x128xf32>
    %101 = arith.addf %93, %100 : vector<5x128xf32>
    %102 = vector.shape_cast %101 : vector<5x128xf32> to vector<1x5x128xf32>
    %cst_37 = arith.constant dense<0.000000e+00> : vector<1xf32>
    %103 = vector.multi_reduction <add>, %102, %cst_37 [1, 2] : vector<1x5x128xf32> to vector<1xf32>
    %104 = vector.shape_cast %103 : vector<1xf32> to vector<1x1x1xf32>
    %105 = vector.extract %104[0, 0, 0] : f32 from vector<1x1x1xf32>
    %106 = vector.extract_strided_slice %101 {offsets = [0, 0], sizes = [1, 128], strides = [1, 1]} : vector<5x128xf32> to vector<1x128xf32>
    %107 = vector.shape_cast %106 : vector<1x128xf32> to vector<1x1x128xf32>
    %cst_38 = arith.constant dense<0.000000e+00> : vector<1xf32>
    %108 = vector.multi_reduction <add>, %107, %cst_38 [1, 2] : vector<1x1x128xf32> to vector<1xf32>
    %109 = vector.shape_cast %108 : vector<1xf32> to vector<1x1x1xf32>
    %110 = vector.extract %109[0, 0, 0] : f32 from vector<1x1x1xf32>
    %111 = arith.addf %73, %110 : f32
    %112 = arith.subf %105, %110 : f32
    %113 = arith.addf %75, %112 : f32
    %114 = tpu.iota {dimensions = array<i32: 0>} : vector<8x128xi32>
    %115 = tpu.iota {dimensions = array<i32: 1>} : vector<8x128xi32>
    %c0_i32 = arith.constant 0 : i32
    %116 = vector.broadcast %c0_i32 : i32 to vector<8x128xi32>
    %117 = arith.cmpi eq, %114, %116 : vector<8x128xi32>
    %c0_i32_39 = arith.constant 0 : i32
    %118 = vector.broadcast %c0_i32_39 : i32 to vector<8x128xi32>
    %119 = arith.cmpi eq, %115, %118 : vector<8x128xi32>
    %120 = arith.andi %117, %119 : vector<8x128xi1>
    %121 = arith.extui %120 : vector<8x128xi1> to vector<8x128xi32>
    %122 = arith.sitofp %121 : vector<8x128xi32> to vector<8x128xf32>
    %c1_i32 = arith.constant 1 : i32
    %123 = vector.broadcast %c1_i32 : i32 to vector<8x128xi32>
    %124 = arith.cmpi eq, %114, %123 : vector<8x128xi32>
    %c0_i32_40 = arith.constant 0 : i32
    %125 = vector.broadcast %c0_i32_40 : i32 to vector<8x128xi32>
    %126 = arith.cmpi eq, %115, %125 : vector<8x128xi32>
    %127 = arith.andi %124, %126 : vector<8x128xi1>
    %128 = arith.extui %127 : vector<8x128xi1> to vector<8x128xi32>
    %129 = arith.sitofp %128 : vector<8x128xi32> to vector<8x128xf32>
    %c2_i32 = arith.constant 2 : i32
    %130 = vector.broadcast %c2_i32 : i32 to vector<8x128xi32>
    %131 = arith.cmpi eq, %114, %130 : vector<8x128xi32>
    %c0_i32_41 = arith.constant 0 : i32
    %132 = vector.broadcast %c0_i32_41 : i32 to vector<8x128xi32>
    %133 = arith.cmpi eq, %115, %132 : vector<8x128xi32>
    %134 = arith.andi %131, %133 : vector<8x128xi1>
    %135 = arith.extui %134 : vector<8x128xi1> to vector<8x128xi32>
    %136 = arith.sitofp %135 : vector<8x128xi32> to vector<8x128xf32>
    %137 = vector.broadcast %111 : f32 to vector<8x128xf32>
    %138 = arith.mulf %137, %122 : vector<8x128xf32>
    %139 = vector.broadcast %113 : f32 to vector<8x128xf32>
    %140 = arith.mulf %139, %129 : vector<8x128xf32>
    %141 = arith.addf %138, %140 : vector<8x128xf32>
    %142 = vector.broadcast %88 : f32 to vector<8x128xf32>
    %143 = arith.mulf %142, %136 : vector<8x128xf32>
    %144 = arith.addf %141, %143 : vector<8x128xf32>
    %c0_42 = arith.constant 0 : index
    %c0_43 = arith.constant 0 : index
    %c0_44 = arith.constant 0 : index
    %145 = vector.load %arg5[%c0_42, %c0_43, %c0_44] : memref<1x8x128xf32, #tpu.memory_space<vmem>>, vector<1x8x128xf32>
    %146 = vector.shape_cast %145 : vector<1x8x128xf32> to vector<8x128xf32>
    %147 = vector.shape_cast %144 : vector<8x128xf32> to vector<1x8x128xf32>
    tpu.vector_store %arg5[%c0_42, %c0_43, %c0_44], %147 {strides = array<i32>} : memref<1x8x128xf32, #tpu.memory_space<vmem>>, vector<1x8x128xf32>,
    return
  }
  func.func @transform_0(%arg0: i32) -> (i32, i32) {
    %c0_i32 = arith.constant 0 : i32
    %c0_i32_0 = arith.constant 0 : i32
    return %c0_i32, %arg0 : i32, i32
  }
  func.func @transform_1(%arg0: i32) -> (i32, i32) {
    %c0_i32 = arith.constant 0 : i32
    %c0_i32_0 = arith.constant 0 : i32
    return %c0_i32, %arg0 : i32, i32
  }
  func.func @transform_2(%arg0: i32) -> (i32, i32) {
    %c0_i32 = arith.constant 0 : i32
    %c0_i32_0 = arith.constant 0 : i32
    return %c0_i32, %arg0 : i32, i32
  }
  func.func @transform_3(%arg0: i32) -> (i32, i32) {
    %c0_i32 = arith.constant 0 : i32
    %c0_i32_0 = arith.constant 0 : i32
    return %c0_i32, %arg0 : i32, i32
  }
  func.func @transform_4(%arg0: i32) -> (i32, i32, i32) {
    %c0_i32 = arith.constant 0 : i32
    %c0_i32_0 = arith.constant 0 : i32
    %c0_i32_1 = arith.constant 0 : i32
    return %arg0, %c0_i32, %c0_i32_0 : i32, i32, i32
  }
}

</mosaic_0001>

<llo_original>
// kernel: tpu_custom_call.1
$region0: #{tpu_custom_call.1}
  #allocation0 [shape = 'u32[]', space=smem, size = 0x4, offset = 0x4, fixed_abs, tag = 'smem constant byte address 0x4 - core index']
  #allocation1 [shape = 'u32[72,128]{1,0:T(1,128)}', space=vmem, size = 0x9000, scoped, tag = 'internal scratch']
  %s0 = inlined_call_operand.hbm [shape: f32[12,256], index: 0, kind: input, shape index: {}]
  %s1 = inlined_call_operand.hbm [shape: f32[15,256], index: 1, kind: input, shape index: {}]
  %s2 = inlined_call_operand.hbm [shape: f32[4,256], index: 2, kind: input, shape index: {}]
  %s3 = inlined_call_operand.hbm [shape: f32[5,256], index: 3, kind: input, shape index: {}]
  %s4 = inlined_call_operand.hbm [shape: f32[2,8,128], index: 4, kind: output, shape index: {}]
  %s5 = sld [smem:[#allocation0]]
  $region65: #{tpu_custom_call.1} parent=0
    _
  %s7 = ssub.s32 1, %s5
  %s8 = scalar_select 0, %s7, %s5
  $region1: #{tpu_custom_call.1} parent=0
    #allocation2 [shape = 'u8[16384]{0}', space=vmem, size = 0x4000, scoped, tag = 'input window, operand 0']
    #allocation3 [shape = 's32[2]{0}', space=sflag, size = 0x8, scoped, tag = 'scoped memory for tpu_custom_call.1']
    #allocation4 [shape = 's32[2]{0}', space=sflag, size = 0x8, scoped, tag = 'scoped memory for tpu_custom_call.1']
    #allocation5 [shape = 'u8[16384]{0}', space=vmem, size = 0x4000, scoped, tag = 'input window, operand 1']
    #allocation6 [shape = 's32[2]{0}', space=sflag, size = 0x8, scoped, tag = 'scoped memory for tpu_custom_call.1']
    #allocation7 [shape = 'u8[4096]{0}', space=vmem, size = 0x1000, scoped, tag = 'input window, operand 2']
    #allocation8 [shape = 'u8[8192]{0}', space=vmem, size = 0x2000, scoped, tag = 'input window, operand 3']
    #allocation9 [shape = 's32[2]{0}', space=sflag, size = 0x8, scoped, tag = 'scoped memory for tpu_custom_call.1']
    #allocation10 [shape = 'u8[8192]{0}', space=vmem, size = 0x2000, scoped, tag = 'output window, operand 0']
    %9 = vsyncpa [#allocation3], 0
    %s10 = scalar_lea.sflag [#allocation3], 1
    %11 = vsyncpa %s10, 0
    %12 = vsyncpa [#allocation6], 0
    %s13 = scalar_lea.sflag [#allocation6], 1
    %14 = vsyncpa %s13, 0
    %15 = vsyncpa [#allocation9], 0
    %s16 = scalar_lea.sflag [#allocation9], 1
    %17 = vsyncpa %s16, 0
    %18 = vsyncpa [#allocation4], 0
    %s19 = scalar_lea.sflag [#allocation4], 1
    %20 = vsyncpa %s19, 0
    loop: start=0, step=1, limit=4
    $region2: #{tpu_custom_call.1} parent=1 // loop_pre_header
      _
    $region3: #{tpu_custom_call.1} parent=1 // loop_header
      %s22 = sphi 0, %s26
      %p23 = scmp.ge.s32.totalorder %s22, 4
      %s32 = sphi 0, %s34
      %s35 = sphi 0, %s32
      %s36 = sphi 0, %s35
      %s52 = sphi 0, %s36
      %s58 = sphi 0, %s60
      %s61 = sphi 0, %s58
      %s62 = sphi 0, %s61
      %s78 = sphi 0, %s62
      %s84 = sphi 0, %s86
      %s87 = sphi 0, %s84
      %s88 = sphi 0, %s87
      %s104 = sphi 0, %s88
      %s110 = sphi 0, %s112
      %s113 = sphi 0, %s110
      %s114 = sphi 0, %s113
      %s130 = sphi 0, %s114
      %s136 = sphi 0, %s138
      %s139 = sphi 0, %s136
      %s140 = sphi 0, %s139
      %s156 = sphi 0, %s140
    $region4: #{tpu_custom_call.1} parent=1 // loop_header_branch
      %25 = sbr.rel (%p23) target = $region8
    $region5: #{tpu_custom_call.1} parent=1 // loop_body
      %s27 = ssub.s32 %s22, 1
      %s28 = ssub.s32 %s22, 2
      %s29 = sadd.s32 %s22, 1
      %s30 = ssub.s32 %s22, %s29
      %p31 = scmp.eq.s32.totalorder %s30, 0
      %s33 = sadd.s32 %s32, 1
      %s34 = scalar_select %p31, %s32, %s33
      %p37 = pneg %p31
      %p38 = scmp.eq.s32.totalorder %s22, 1
      %p39 = por %p37, %p38
      %p40 = scmp.ne.s32.totalorder %s32, %s35
      %p41 = scmp.eq.s32.totalorder %s22, 0
      %p42 = por %p40, %p41
      %p43 = scmp.ne.s32.totalorder %s32, %s35
      %p44 = scmp.eq.s32.totalorder %s27, 1
      %p45 = por %p43, %p44
      %p46 = scmp.ne.s32.totalorder %s35, %s36
      %p47 = scmp.eq.s32.totalorder %s27, 0
      %p48 = por %p46, %p47
      %p49 = scmp.ne.s32.totalorder %s35, %s36
      %p50 = scmp.eq.s32.totalorder %s28, 1
      %p51 = por %p49, %p50
      %p53 = scmp.ne.s32.totalorder %s36, %s52
      %p54 = scmp.eq.s32.totalorder %s28, 0
      %p55 = por %p53, %p54
      %s56 = ssub.s32 %s22, %s29
      %p57 = scmp.eq.s32.totalorder %s56, 0
      %s59 = sadd.s32 %s58, 1
      %s60 = scalar_select %p57, %s58, %s59
      %p63 = pneg %p57
      %p64 = scmp.eq.s32.totalorder %s22, 1
      %p65 = por %p63, %p64
      %p66 = scmp.ne.s32.totalorder %s58, %s61
      %p67 = scmp.eq.s32.totalorder %s22, 0
      %p68 = por %p66, %p67
      %p69 = scmp.ne.s32.totalorder %s58, %s61
      %p70 = scmp.eq.s32.totalorder %s27, 1
      %p71 = por %p69, %p70
      %p72 = scmp.ne.s32.totalorder %s61, %s62
      %p73 = scmp.eq.s32.totalorder %s27, 0
      %p74 = por %p72, %p73
      %p75 = scmp.ne.s32.totalorder %s61, %s62
      %p76 = scmp.eq.s32.totalorder %s28, 1
      %p77 = por %p75, %p76
      %p79 = scmp.ne.s32.totalorder %s62, %s78
      %p80 = scmp.eq.s32.totalorder %s28, 0
      %p81 = por %p79, %p80
      %s82 = ssub.s32 %s22, %s29
      %p83 = scmp.eq.s32.totalorder %s82, 0
      %s85 = sadd.s32 %s84, 1
      %s86 = scalar_select %p83, %s84, %s85
      %p89 = pneg %p83
      %p90 = scmp.eq.s32.totalorder %s22, 1
      %p91 = por %p89, %p90
      %p92 = scmp.ne.s32.totalorder %s84, %s87
      %p93 = scmp.eq.s32.totalorder %s22, 0
      %p94 = por %p92, %p93
      %p95 = scmp.ne.s32.totalorder %s84, %s87
      %p96 = scmp.eq.s32.totalorder %s27, 1
      %p97 = por %p95, %p96
      %p98 = scmp.ne.s32.totalorder %s87, %s88
      %p99 = scmp.eq.s32.totalorder %s27, 0
      %p100 = por %p98, %p99
      %p101 = scmp.ne.s32.totalorder %s87, %s88
      %p102 = scmp.eq.s32.totalorder %s28, 1
      %p103 = por %p101, %p102
      %p105 = scmp.ne.s32.totalorder %s88, %s104
      %p106 = scmp.eq.s32.totalorder %s28, 0
      %p107 = por %p105, %p106
      %s108 = ssub.s32 %s22, %s29
      %p109 = scmp.eq.s32.totalorder %s108, 0
      %s111 = sadd.s32 %s110, 1
      %s112 = scalar_select %p109, %s110, %s111
      %p115 = pneg %p109
      %p116 = scmp.eq.s32.totalorder %s22, 1
      %p117 = por %p115, %p116
      %p118 = scmp.ne.s32.totalorder %s110, %s113
      %p119 = scmp.eq.s32.totalorder %s22, 0
      %p120 = por %p118, %p119
      %p121 = scmp.ne.s32.totalorder %s110, %s113
      %p122 = scmp.eq.s32.totalorder %s27, 1
      %p123 = por %p121, %p122
      %p124 = scmp.ne.s32.totalorder %s113, %s114
      %p125 = scmp.eq.s32.totalorder %s27, 0
      %p126 = por %p124, %p125
      %p127 = scmp.ne.s32.totalorder %s113, %s114
      %p128 = scmp.eq.s32.totalorder %s28, 1
      %p129 = por %p127, %p128
      %p131 = scmp.ne.s32.totalorder %s114, %s130
      %p132 = scmp.eq.s32.totalorder %s28, 0
      %p133 = por %p131, %p132
      %s134 = ssub.s32 %s22, %s29
      %p135 = scmp.eq.s32.totalorder %s134, 0
      %s137 = sadd.s32 %s136, 1
      %s138 = scalar_select %p135, %s136, %s137
      %p141 = pneg %p135
      %p142 = scmp.eq.s32.totalorder %s22, 1
      %p143 = por %p141, %p142
      %p144 = scmp.ne.s32.totalorder %s136, %s139
      %p145 = scmp.eq.s32.totalorder %s22, 0
      %p146 = por %p144, %p145
      %p147 = scmp.ne.s32.totalorder %s136, %s139
      %p148 = scmp.eq.s32.totalorder %s27, 1
      %p149 = por %p147, %p148
      %p150 = scmp.ne.s32.totalorder %s139, %s140
      %p151 = scmp.eq.s32.totalorder %s27, 0
      %p152 = por %p150, %p151
      %p153 = scmp.ne.s32.totalorder %s139, %s140
      %p154 = scmp.eq.s32.totalorder %s28, 1
      %p155 = por %p153, %p154
      %p157 = scmp.ne.s32.totalorder %s140, %s156
      %p158 = scmp.eq.s32.totalorder %s28, 0
      %p159 = por %p157, %p158
      %p160 = scmp.le.s32.totalorder 1, %s22
      %p161 = scmp.lt.s32.totalorder %s22, 3
      %p162 = pnand %p160, %p161
      %p163 = pneg %p162
      // Predicated region
      $region9: #{tpu_custom_call.1} parent=5 // pred_check
        _
      $region10: #{tpu_custom_call.1} parent=5 // pred_check_branch
        %165 = sbr.rel (%p162) target = $region12
      $region11: #{tpu_custom_call.1} parent=5 // pred_region
        %s166 = ssub.s32 %s22, 1
      $region12: #{tpu_custom_call.1} parent=5 // pred_fallthru
        _
      %p167 = scmp.lt.s32.totalorder %s22, 2
      // Predicated region
      $region13: #{tpu_custom_call.1} parent=5 // pred_check
        %p168 = pneg %p167
      $region14: #{tpu_custom_call.1} parent=5 // pred_check_branch
        %170 = sbr.rel (%p168) target = $region16
      $region15: #{tpu_custom_call.1} parent=5 // pred_region
        // Predicated region
        $region17: #{tpu_custom_call.1} parent=15 // pred_check
          %p171 = pneg %p42
        $region18: #{tpu_custom_call.1} parent=15 // pred_check_branch
          %173 = sbr.rel (%p171) target = $region20
        $region19: #{tpu_custom_call.1} parent=15 // pred_region
          %s174 = sand.u32 %s32, 1
          %s175 = scalar_lea.sflag [#allocation3], %s174
          %s176 = sand.u32 %s32, 1
          %s177 = smul.addr %s176, 16
          %s178 = scalar_lea.vmem [#allocation2], %s177
          %180 = vsyncadd %s175, 0
          %s181 = smul.addr %s22, 8
          %s182 = scalar_lea.hbm %s0, %s181
          %s183 = sshll.u32 %s182, 4
          %s184 = int_to_ptr.hbm [resolvable:$true] %s183
          %s185 = sshll.u32 %s178, 4
          %s186 = int_to_ptr.vmem [resolvable:$true] %s185
          %191 = dma.hbm_to_vmem [thread:$0]  %s184, 256, %s186, %s175, 256, 128, 8
        $region20: #{tpu_custom_call.1} parent=15 // pred_fallthru
          _
        // Predicated region
        $region21: #{tpu_custom_call.1} parent=15 // pred_check
          %p192 = pneg %p68
        $region22: #{tpu_custom_call.1} parent=15 // pred_check_branch
          %194 = sbr.rel (%p192) target = $region24
        $region23: #{tpu_custom_call.1} parent=15 // pred_region
          %s195 = sand.u32 %s22, 1
          %s196 = scalar_lea.sflag [#allocation6], %s195
          %s197 = sand.u32 %s58, 1
          %s198 = smul.addr %s197, 16
          %s199 = scalar_lea.vmem [#allocation5], %s198
          %201 = vsyncadd %s196, 0
          %s202 = smul.addr %s22, 8
          %s203 = scalar_lea.hbm %s1, %s202
          %s204 = sshll.u32 %s203, 4
          %s205 = int_to_ptr.hbm [resolvable:$true] %s204
          %s206 = sshll.u32 %s199, 4
          %s207 = int_to_ptr.vmem [resolvable:$true] %s206
          %212 = dma.hbm_to_vmem [thread:$0]  %s205, 256, %s207, %s196, 256, 128, 8
        $region24: #{tpu_custom_call.1} parent=15 // pred_fallthru
          _
        // Predicated region
        $region25: #{tpu_custom_call.1} parent=15 // pred_check
          %p213 = pneg %p94
        $region26: #{tpu_custom_call.1} parent=15 // pred_check_branch
          %215 = sbr.rel (%p213) target = $region28
        $region27: #{tpu_custom_call.1} parent=15 // pred_region
          %s216 = sand.u32 %s22, 1
          %s217 = scalar_lea.sflag [#allocation6], %s216
          %s218 = sand.u32 %s84, 1
          %s219 = smul.addr %s218, 4
          %s220 = scalar_lea.vmem [#allocation7], %s219
          %222 = vsyncadd %s217, 0
          %s223 = smul.addr %s22, 4
          %s224 = scalar_lea.hbm %s2, %s223
          %s226 = sshll.u32 %s224, 4
          %s227 = int_to_ptr.hbm [resolvable:$true] %s226
          %s228 = sshll.u32 %s220, 4
          %s229 = int_to_ptr.vmem [resolvable:$true] %s228
          %231 = dma.hbm_to_vmem [thread:$0]  %s227, 64, %s229, %s217
        $region28: #{tpu_custom_call.1} parent=15 // pred_fallthru
          _
        // Predicated region
        $region29: #{tpu_custom_call.1} parent=15 // pred_check
          %p232 = pneg %p120
        $region30: #{tpu_custom_call.1} parent=15 // pred_check_branch
          %234 = sbr.rel (%p232) target = $region32
        $region31: #{tpu_custom_call.1} parent=15 // pred_region
          %s235 = sand.u32 %s110, 1
          %s236 = scalar_lea.sflag [#allocation9], %s235
          %s237 = sand.u32 %s110, 1
          %s238 = smul.addr %s237, 8
          %s239 = scalar_lea.vmem [#allocation8], %s238
          %241 = vsyncadd %s236, 0
          %s242 = smul.addr %s22, 8
          %s243 = scalar_lea.hbm %s3, %s242
          %s245 = sshll.u32 %s243, 4
          %s246 = int_to_ptr.hbm [resolvable:$true] %s245
          %s247 = sshll.u32 %s239, 4
          %s248 = int_to_ptr.vmem [resolvable:$true] %s247
          %250 = dma.hbm_to_vmem [thread:$0]  %s246, 128, %s248, %s236
        $region32: #{tpu_custom_call.1} parent=15 // pred_fallthru
          _
      $region16: #{tpu_custom_call.1} parent=5 // pred_fallthru
        _
      %p251 = scmp.le.s32.totalorder 1, %s22
      %p252 = scmp.lt.s32.totalorder %s22, 3
      %p253 = pnand %p251, %p252
      %p254 = pneg %p253
      // Predicated region
      $region33: #{tpu_custom_call.1} parent=5 // pred_check
        _
      $region34: #{tpu_custom_call.1} parent=5 // pred_check_branch
        %256 = sbr.rel (%p253) target = $region36
      $region35: #{tpu_custom_call.1} parent=5 // pred_region
        %s257 = ssub.s32 %s22, 1
        %s258 = sand.u32 %s35, 1
        %s259 = scalar_lea.sflag [#allocation3], %s258
        %s260 = sand.u32 %s35, 1
        %s261 = smul.addr %s260, 16
        %s262 = scalar_lea.vmem [#allocation2], %s261
        // Predicated region
        $region37: #{tpu_custom_call.1} parent=35 // pred_check
          %p263 = pneg %p48
        $region38: #{tpu_custom_call.1} parent=35 // pred_check_branch
          %265 = sbr.rel (%p263) target = $region40
        $region39: #{tpu_custom_call.1} parent=35 // pred_region
          %267 = dma.done %s259, 256
        $region40: #{tpu_custom_call.1} parent=35 // pred_fallthru
          _
        %s268 = sand.u32 %s27, 1
        %s269 = scalar_lea.sflag [#allocation6], %s268
        %s270 = sand.u32 %s61, 1
        %s271 = smul.addr %s270, 16
        %s272 = scalar_lea.vmem [#allocation5], %s271
        // Predicated region
        $region41: #{tpu_custom_call.1} parent=35 // pred_check
          %p273 = pneg %p74
        $region42: #{tpu_custom_call.1} parent=35 // pred_check_branch
          %275 = sbr.rel (%p273) target = $region44
        $region43: #{tpu_custom_call.1} parent=35 // pred_region
          %277 = dma.done %s269, 256
        $region44: #{tpu_custom_call.1} parent=35 // pred_fallthru
          _
        %s278 = sand.u32 %s27, 1
        %s279 = scalar_lea.sflag [#allocation6], %s278
        %s280 = sand.u32 %s87, 1
        %s281 = smul.addr %s280, 4
        %s282 = scalar_lea.vmem [#allocation7], %s281
        // Predicated region
        $region45: #{tpu_custom_call.1} parent=35 // pred_check
          %p283 = pneg %p100
        $region46: #{tpu_custom_call.1} parent=35 // pred_check_branch
          %285 = sbr.rel (%p283) target = $region48
        $region47: #{tpu_custom_call.1} parent=35 // pred_region
          %287 = dma.done %s279, 64
        $region48: #{tpu_custom_call.1} parent=35 // pred_fallthru
          _
        %s288 = sand.u32 %s113, 1
        %s289 = scalar_lea.sflag [#allocation9], %s288
        %s290 = sand.u32 %s113, 1
        %s291 = smul.addr %s290, 8
        %s292 = scalar_lea.vmem [#allocation8], %s291
        // Predicated region
        $region49: #{tpu_custom_call.1} parent=35 // pred_check
          %p293 = pneg %p126
        $region50: #{tpu_custom_call.1} parent=35 // pred_check_branch
          %295 = sbr.rel (%p293) target = $region52
        $region51: #{tpu_custom_call.1} parent=35 // pred_region
          %297 = dma.done %s289, 128
        $region52: #{tpu_custom_call.1} parent=35 // pred_fallthru
          _
        %s298 = sand.u32 %s35, 1
        %s299 = scalar_lea.sflag [#allocation3], %s298
        %s300 = sand.u32 %s35, 1
        %s301 = smul.addr %s300, 16
        %s302 = scalar_lea.vmem [#allocation2], %s301
        %p303 = pneg %p48
        %p304 = pneg %p45
        %s305 = sand.u32 %s27, 1
        %s306 = scalar_lea.sflag [#allocation6], %s305
        %s307 = sand.u32 %s61, 1
        %s308 = smul.addr %s307, 16
        %s309 = scalar_lea.vmem [#allocation5], %s308
        %p310 = pneg %p74
        %p311 = pneg %p71
        %s312 = sand.u32 %s27, 1
        %s313 = scalar_lea.sflag [#allocation6], %s312
        %s314 = sand.u32 %s87, 1
        %s315 = smul.addr %s314, 4
        %s316 = scalar_lea.vmem [#allocation7], %s315
        %p317 = pneg %p100
        %p318 = pneg %p97
        %s319 = sand.u32 %s113, 1
        %s320 = scalar_lea.sflag [#allocation9], %s319
        %s321 = sand.u32 %s113, 1
        %s322 = smul.addr %s321, 8
        %s323 = scalar_lea.vmem [#allocation8], %s322
        %p324 = pneg %p126
        %p325 = pneg %p123
        %p326 = pneg %p152
        %p327 = pneg %p149
        %s328 = sand.u32 %s139, 1
        %s329 = scalar_lea.sflag [#allocation4], %s328
        %s330 = sand.u32 %s139, 1
        %s331 = smul.addr %s330, 8
        %s332 = scalar_lea.vmem [#allocation10], %s331
        %v333 = vld [vmem:[%s282] sm:$0xf]
        %v334 = vld [vmem:[%s292] sm:$0x1f]
        %v335 = vld [vmem:[%s262] sm:$0xf]
        %v336 = vperm.slane %v334, 0
        %v337 = vmul.f32 %v335, %v336
        %v338 = vsub.f32 %v337, %v333
        %v339 = vmul.f32 %v338, %v338
        %vm340 = vcmask 1043456
        %v341 = vsel %vm340, %v339, 0.0
        %342 = vadd.xlane.f32.xlu0 %v341
        %v343 = vpop.xlane.xlu0 %342
        %v344 = vrot.slane %v343, 4
        %v345 = vadd.f32 %v343, %v344
        %v346 = vrot.slane %v345, 2
        %v347 = vadd.f32 %v345, %v346
        %v348 = vrot.slane %v347, 1
        %v349 = vadd.f32 %v347, %v348
        %s350 = vtos %v349
        %s351 = sadd.f32 %s350, 0.0
        %v352 = vld [vmem:[%s272] sm:$0x1f]
        %v353 = vmax.f32 %v352, 0.0
        %v354 = vmul.f32 %v352, %v334
        %v355 = vsub.f32 %v353, %v354
        %v356 = vand.u32 2147483647, %v352
        %v357 = vsub.f32 0.0, %v356
        %v358 = vmul.f32 %v357, 1.442695
        %v359 = vpow.pop %v358
        %v360 = vadd.f32 %v359, 1.0
        %v361 = vlog2.pop %v360
        %v362 = vmul.f32 %v361, 0.6931472
        %v363 = vadd.f32 %v355, %v362
        %vm364 = vcmask 1044480
        %v365 = vsel %vm364, %v363, 0.0
        %366 = vadd.xlane.f32.xlu0 %v365
        %v367 = vpop.xlane.xlu0 %366
        %v368 = vrot.slane %v367, 4
        %v369 = vadd.f32 %v367, %v368
        %v370 = vrot.slane %v369, 2
        %v371 = vadd.f32 %v369, %v370
        %v372 = vrot.slane %v371, 1
        %v373 = vadd.f32 %v371, %v372
        %s374 = vtos %v373
        %vm375 = vcmask 1040384
        %v376 = vsel %vm375, %v363, 0.0
        %377 = vadd.xlane.f32.xlu0 %v376
        %v378 = vpop.xlane.xlu0 %377
        %v379 = vrot.slane %v378, 4
        %v380 = vadd.f32 %v378, %v379
        %v381 = vrot.slane %v380, 2
        %v382 = vadd.f32 %v380, %v381
        %v383 = vrot.slane %v382, 1
        %v384 = vadd.f32 %v382, %v383
        %s385 = vtos %v384
        %s386 = sadd.f32 %s385, 0.0
        %s387 = ssub.f32 %s374, %s385
        %s388 = sadd.f32 %s387, 0.0
        %v389 = vld [vmem:[%s262 + $0x4] sm:$0xf]
        %v390 = vmul.f32 %v389, %v336
        %v391 = vsub.f32 %v390, %v333
        %v392 = vmul.f32 %v391, %v391
        %v393 = vsel %vm340, %v392, 0.0
        %394 = vadd.xlane.f32.xlu0 %v393
        %v395 = vpop.xlane.xlu0 %394
        %v396 = vrot.slane %v395, 4
        %v397 = vadd.f32 %v395, %v396
        %v398 = vrot.slane %v397, 2
        %v399 = vadd.f32 %v397, %v398
        %v400 = vrot.slane %v399, 1
        %v401 = vadd.f32 %v399, %v400
        %s402 = vtos %v401
        %s403 = sadd.f32 %s351, %s402
        %v404 = vld [vmem:[%s272 + $0x5] sm:$0x1f]
        %v405 = vmax.f32 %v404, 0.0
        %v406 = vmul.f32 %v404, %v334
        %v407 = vsub.f32 %v405, %v406
        %v408 = vand.u32 2147483647, %v404
        %v409 = vsub.f32 0.0, %v408
        %v410 = vmul.f32 %v409, 1.442695
        %v411 = vpow.pop %v410
        %v412 = vadd.f32 %v411, 1.0
        %v413 = vlog2.pop %v412
        %v414 = vmul.f32 %v413, 0.6931472
        %v415 = vadd.f32 %v407, %v414
        %v416 = vsel %vm364, %v415, 0.0
        %417 = vadd.xlane.f32.xlu0 %v416
        %v418 = vpop.xlane.xlu0 %417
        %v419 = vrot.slane %v418, 4
        %v420 = vadd.f32 %v418, %v419
        %v421 = vrot.slane %v420, 2
        %v422 = vadd.f32 %v420, %v421
        %v423 = vrot.slane %v422, 1
        %v424 = vadd.f32 %v422, %v423
        %s425 = vtos %v424
        %v426 = vsel %vm375, %v415, 0.0
        %427 = vadd.xlane.f32.xlu0 %v426
        %v428 = vpop.xlane.xlu0 %427
        %v429 = vrot.slane %v428, 4
        %v430 = vadd.f32 %v428, %v429
        %v431 = vrot.slane %v430, 2
        %v432 = vadd.f32 %v430, %v431
        %v433 = vrot.slane %v432, 1
        %v434 = vadd.f32 %v432, %v433
        %s435 = vtos %v434
        %s436 = sadd.f32 %s386, %s435
        %s437 = ssub.f32 %s425, %s435
        %s438 = sadd.f32 %s388, %s437
        %v439 = vld [vmem:[%s262 + $0x8] sm:$0xf]
        %v440 = vmul.f32 %v439, %v336
        %v441 = vsub.f32 %v440, %v333
        %v442 = vmul.f32 %v441, %v441
        %v443 = vsel %vm340, %v442, 0.0
        %444 = vadd.xlane.f32.xlu0 %v443
        %v445 = vpop.xlane.xlu0 %444
        %v446 = vrot.slane %v445, 4
        %v447 = vadd.f32 %v445, %v446
        %v448 = vrot.slane %v447, 2
        %v449 = vadd.f32 %v447, %v448
        %v450 = vrot.slane %v449, 1
        %v451 = vadd.f32 %v449, %v450
        %s452 = vtos %v451
        %s453 = sadd.f32 %s403, %s452
        %v454 = vld [vmem:[%s272 + $0xa] sm:$0x1f]
        %v455 = vmax.f32 %v454, 0.0
        %v456 = vmul.f32 %v454, %v334
        %v457 = vsub.f32 %v455, %v456
        %v458 = vand.u32 2147483647, %v454
        %v459 = vsub.f32 0.0, %v458
        %v460 = vmul.f32 %v459, 1.442695
        %v461 = vpow.pop %v460
        %v462 = vadd.f32 %v461, 1.0
        %v463 = vlog2.pop %v462
        %v464 = vmul.f32 %v463, 0.6931472
        %v465 = vadd.f32 %v457, %v464
        %v466 = vsel %vm364, %v465, 0.0
        %467 = vadd.xlane.f32.xlu0 %v466
        %v468 = vpop.xlane.xlu0 %467
        %v469 = vrot.slane %v468, 4
        %v470 = vadd.f32 %v468, %v469
        %v471 = vrot.slane %v470, 2
        %v472 = vadd.f32 %v470, %v471
        %v473 = vrot.slane %v472, 1
        %v474 = vadd.f32 %v472, %v473
        %s475 = vtos %v474
        %v476 = vsel %vm375, %v465, 0.0
        %477 = vadd.xlane.f32.xlu0 %v476
        %v478 = vpop.xlane.xlu0 %477
        %v479 = vrot.slane %v478, 4
        %v480 = vadd.f32 %v478, %v479
        %v481 = vrot.slane %v480, 2
        %v482 = vadd.f32 %v480, %v481
        %v483 = vrot.slane %v482, 1
        %v484 = vadd.f32 %v482, %v483
        %s485 = vtos %v484
        %s486 = sadd.f32 %s436, %s485
        %s487 = ssub.f32 %s475, %s485
        %s488 = sadd.f32 %s438, %s487
        %v489 = vlaneseq
        %v490 = vshrl.u32 %v489, 7
        %v491 = vlaneseq
        %v492 = vand.u32 %v491, 127
        %vm493 = vcmp.eq.s32.totalorder %v490, 0
        %vm494 = vcmp.eq.s32.totalorder %v492, 0
        %vm495 = vmand %vm493, %vm494
        %v496 = vsel %vm495, 1, 0
        %v497 = vcvt.s32.f32 %v496
        %vm498 = vcmp.eq.s32.totalorder %v490, 1
        %vm499 = vmand %vm498, %vm494
        %v500 = vsel %vm499, 1, 0
        %v501 = vcvt.s32.f32 %v500
        %vm502 = vcmp.eq.s32.totalorder %v490, 2
        %vm503 = vmand %vm502, %vm494
        %v504 = vsel %vm503, 1, 0
        %v505 = vcvt.s32.f32 %v504
        %v506 = vstv %s486
        %v507 = vmul.f32 %v506, %v497
        %v508 = vstv %s488
        %v509 = vmul.f32 %v508, %v501
        %v510 = vadd.f32 %v507, %v509
        %v511 = vstv %s453
        %v512 = vmul.f32 %v511, %v505
        %v513 = vadd.f32 %v510, %v512
        %514 = vst [vmem:[%s332] sm:$0xff] %v513
        %s515 = sand.u32 %s139, 1
        %s516 = scalar_lea.sflag [#allocation4], %s515
        %s517 = sand.u32 %s139, 1
        %s518 = smul.addr %s517, 8
        %s519 = scalar_lea.vmem [#allocation10], %s518
        // Predicated region
        $region53: #{tpu_custom_call.1} parent=35 // pred_check
          %p520 = pneg %p149
        $region54: #{tpu_custom_call.1} parent=35 // pred_check_branch
          %522 = sbr.rel (%p520) target = $region56
        $region55: #{tpu_custom_call.1} parent=35 // pred_region
          %524 = vsyncadd %s516, 0
          %s525 = smul.addr %s27, 8
          %s526 = scalar_lea.hbm %s4, %s525
          %s528 = sshll.u32 %s519, 4
          %s529 = int_to_ptr.vmem [resolvable:$true] %s528
          %s530 = sshll.u32 %s526, 4
          %s531 = int_to_ptr.hbm [resolvable:$true] %s530
          %533 = dma.vmem_to_hbm [thread:$0]  %s529, 128, %s531, %s516
        $region56: #{tpu_custom_call.1} parent=35 // pred_fallthru
          _
      $region36: #{tpu_custom_call.1} parent=5 // pred_fallthru
        _
      %p534 = scmp.le.s32.totalorder 2, %s22
      // Predicated region
      $region57: #{tpu_custom_call.1} parent=5 // pred_check
        %p535 = pneg %p534
      $region58: #{tpu_custom_call.1} parent=5 // pred_check_branch
        %537 = sbr.rel (%p535) target = $region60
      $region59: #{tpu_custom_call.1} parent=5 // pred_region
        %s538 = ssub.s32 %s22, 2
        // Predicated region
        $region61: #{tpu_custom_call.1} parent=59 // pred_check
          %p539 = pneg %p155
        $region62: #{tpu_custom_call.1} parent=59 // pred_check_branch
          %541 = sbr.rel (%p539) target = $region64
        $region63: #{tpu_custom_call.1} parent=59 // pred_region
          %s542 = sand.u32 %s140, 1
          %s543 = scalar_lea.sflag [#allocation4], %s542
          %s544 = sand.u32 %s140, 1
          %s545 = smul.addr %s544, 8
          %s546 = scalar_lea.vmem [#allocation10], %s545
          %548 = dma.done %s543, 128
        $region64: #{tpu_custom_call.1} parent=59 // pred_fallthru
          _
      $region60: #{tpu_custom_call.1} parent=5 // pred_fallthru
        _
    $region6: #{tpu_custom_call.1} parent=1 // loop_footer
      %s26 = sadd.s32 1, %s22
    $region7: #{tpu_custom_call.1} parent=1 // loop_footer_branch
      %21 = sbr.rel target = $region3
    $region8: #{tpu_custom_call.1} parent=1 // loop_exit
      _
    %549 = vsyncpa [#allocation3], 1
    %s550 = scalar_lea.sflag [#allocation3], 1
    %551 = vsyncpa %s550, 1
    %552 = vsyncpa [#allocation6], 1
    %s553 = scalar_lea.sflag [#allocation6], 1
    %554 = vsyncpa %s553, 1
    %555 = vsyncpa [#allocation9], 1
    %s556 = scalar_lea.sflag [#allocation9], 1
    %557 = vsyncpa %s556, 1
    %558 = vsyncpa [#allocation4], 1
    %s559 = scalar_lea.sflag [#allocation4], 1
    %560 = vsyncpa %s559, 1

</llo_original>
